<compile_context>
chip_gen: v6e
topology: v6e:2x2x1
jax: 0.10.0
libtpu: 0.0.40
codegen_flags: <defaults>
</compile_context>

<pallas_src>
import functools

import jax
import jax.numpy as jnp
from jax.experimental import pallas as pl
from jax.experimental.pallas import tpu as pltpu


# --------------------------------------------------------------------------
# Kernels
# --------------------------------------------------------------------------

def _se_fused_kernel(x_ref, w1_ref, w2_ref, o_ref, *, inv_hw, use_mxu):
    """Single-pass SE on a (TB, C, HW) slab (pool + MLP gate + scale)."""
    # Squeeze: global average pool, f32 accumulation fused with the upcast.
    y = jnp.sum(x_ref[...], axis=-1, dtype=jnp.float32) * inv_hw    # (TB, C)

    w1 = w1_ref[...]                                                 # (C, Cr) f32
    w2 = w2_ref[...]                                                 # (Cr, C) f32

    # Excitation: Linear -> ReLU -> Linear -> Sigmoid.
    if use_mxu:
        h = jnp.maximum(jnp.dot(y, w1, preferred_element_type=jnp.float32), 0.0)
        g = jnp.dot(h, w2, preferred_element_type=jnp.float32)
    else:
        # Degenerate contraction dims (TB < 8 or hidden < 8): two dependent MXU
        # push/pop round-trips are pure serial latency, do it on the VPU/XLU.
        h = jnp.maximum(jnp.sum(y[:, :, None] * w1[None, :, :], axis=1), 0.0)
        g = jnp.sum(h[:, :, None] * w2[None, :, :], axis=1)
    # Note: on v5e the VPU has no bf16 so this cast is neutral there; on
    # v6e/v7x keeping the big multiply in the input dtype halves vreg pressure.
    s = jax.nn.sigmoid(g).astype(o_ref.dtype)                        # (TB, C)

    # Scale: re-read x_ref (fresh VMEM loads -> short live ranges, no slab kept
    # live across the reduce/MLP chain).
    o_ref[...] = (x_ref[...] * s[:, :, None]).astype(o_ref.dtype)


def _se_pool_gate_kernel(x_ref, w1_ref, w2_ref, s_ref, acc_ref, *,
                         inv_hw, hw, hw_c, use_mxu, mask_tail):
    """Two-pass fallback, pass 1: accumulate pooled sums over HW chunks, then
    compute the sigmoid gate at the last chunk.  Grid = (B, n_hw_chunks)."""
    j = pl.program_id(1)

    @pl.when(j == 0)
    def _():
        acc_ref[...] = jnp.zeros_like(acc_ref)

    chunk = x_ref[...]                                               # (1, C, hw_c)
    if mask_tail:
        # The last HW chunk may read past the true H*W; zero the invalid lanes
        # so they do not pollute the sum.
        lane = jax.lax.broadcasted_iota(jnp.int32, chunk.shape, 2)
        chunk = jnp.where(j * hw_c + lane < hw, chunk, jnp.zeros_like(chunk))
    acc_ref[...] += jnp.sum(chunk, axis=-1, dtype=jnp.float32)       # (1, C)

    @pl.when(j == pl.num_programs(1) - 1)
    def _():
        y = acc_ref[...] * inv_hw                                    # (1, C) f32
        w1 = w1_ref[...]
        w2 = w2_ref[...]
        if use_mxu:
            h = jnp.maximum(jnp.dot(y, w1, preferred_element_type=jnp.float32), 0.0)
            g = jnp.dot(h, w2, preferred_element_type=jnp.float32)
        else:
            h = jnp.maximum(jnp.sum(y[:, :, None] * w1[None, :, :], axis=1), 0.0)
            g = jnp.sum(h[:, :, None] * w2[None, :, :], axis=1)
        s_ref[...] = jax.nn.sigmoid(g)[:, :, None]                   # (1, C, 1) f32


def _se_scale_kernel(x_ref, s_ref, o_ref):
    """Two-pass fallback, pass 2: streaming x * gate over (B, HW-chunk) grid."""
    s = s_ref[...].astype(o_ref.dtype)                               # (1, C, 1)
    o_ref[...] = (x_ref[...] * s).astype(o_ref.dtype)


# --------------------------------------------------------------------------
# Wrapper / tiling heuristics
# --------------------------------------------------------------------------

def _tpu_vmem_capacity_bytes():
    """Physical VMEM capacity (per TensorCore).  Conservative default on failure."""
    try:
        info = pltpu.get_tpu_info()
        cap = getattr(info, "vmem_capacity_bytes", None)
        if cap:
            return int(cap)
    except Exception:
        pass
    return 64 << 20   # v7x-conservative


def _pick_batch_tile(b, per_batch_bytes, *, x_vmem_budget, target_bytes=4 << 20):
    """Largest divisor of b whose double-buffered (in + out) block fits the
    budget, aiming for ~target_bytes blocks; keep >=2 grid steps for megacore
    when the halved block is still comfortably large (>= 2 MiB)."""
    cap = max(1, x_vmem_budget // (4 * per_batch_bytes))   # 2 bufs x (in + out)
    want = max(1, -(-target_bytes // per_batch_bytes))      # ceil
    tb = max(1, min(b, cap, want))
    while b % tb:                                           # full blocks only
        tb -= 1
    if b // tb < 2 and b > 1:
        half = tb // 2
        while half > 0 and b % half:
            half -= 1
        if half > 0 and half * per_batch_bytes >= (2 << 20):
            tb = half
    return tb


def se_layer(x_nchw, w1, w2, *, x_vmem_budget=None, force_two_pass=False):
    """SELayer forward.  x_nchw: (B, C, H, W); w1: (C, C//r); w2: (C//r, C)."""
    b, c, h, w = x_nchw.shape
    hw = h * w
    hidden = w1.shape[1]
    dtype_bytes = jnp.dtype(x_nchw.dtype).itemsize

    vmem_cap = _tpu_vmem_capacity_bytes()
    vmem_limit = int(min(vmem_cap * 3 // 4, 100 << 20))
    if x_vmem_budget is None:
        x_vmem_budget = int(min(48 << 20, vmem_cap // 2))

    # No spatial padding: the last block dim equals the full H*W (exempt from
    # the 128-lane divisibility rule); the only cost is a masked tail store.
    x3 = x_nchw.reshape(b, c, hw)
    w1f = w1.astype(jnp.float32)          # hoisted weight casts (tiny arrays)
    w2f = w2.astype(jnp.float32)
    inv_hw = 1.0 / float(hw)
    per_batch_bytes = c * hw * dtype_bytes

    two_pass = force_two_pass or (4 * per_batch_bytes > x_vmem_budget)
    # TODO(synk): on multi-TensorCore parts (v7x) also prefer the two-pass path
    # for b == 1 so the HW-chunk grid axis gives both cores work.

    if not two_pass:
        tb = _pick_batch_tile(b, per_batch_bytes, x_vmem_budget=x_vmem_budget)
        use_mxu = (tb >= 8) and (hidden >= 8)
        kernel = functools.partial(_se_fused_kernel, inv_hw=inv_hw, use_mxu=use_mxu)

        cost = pl.CostEstimate(
            flops=int(2 * b * c * hw + 4 * b * c * hidden),
            transcendentals=int(b * c),
            bytes_accessed=int(2 * b * c * hw * dtype_bytes + 8 * c * hidden),
        )
        out3 = pl.pallas_call(
            kernel,
            out_shape=jax.ShapeDtypeStruct((b, c, hw), x_nchw.dtype),
            grid_spec=pltpu.PrefetchScalarGridSpec(
                num_scalar_prefetch=0,
                grid=(b // tb,),
                in_specs=[
                    pl.BlockSpec((tb, c, hw), lambda i: (i, 0, 0)),      # x slab
                    pl.BlockSpec((c, hidden), lambda i: (0, 0)),         # w1 (f32)
                    pl.BlockSpec((hidden, c), lambda i: (0, 0)),         # w2 (f32)
                ],
                out_specs=pl.BlockSpec((tb, c, hw), lambda i: (i, 0, 0)),
            ),
            compiler_params=pltpu.CompilerParams(
                dimension_semantics=("parallel",),
                vmem_limit_bytes=vmem_limit,
            ),
            cost_estimate=cost,
        )(x3, w1f, w2f)
        return out3.reshape(b, c, h, w)

    # ---------------- two-pass fallback ----------------
    # Pass 1: pool + gate over HW chunks; pass 2: streaming scale.
    chunk_budget = max(x_vmem_budget // 4, c * 128 * dtype_bytes)
    hw_c = max(128, (chunk_budget // (c * dtype_bytes)) // 128 * 128)
    hw_c = min(hw_c, -(-hw // 128) * 128)
    if hw_c >= hw:
        hw_c, n_chunks, mask_tail = hw, 1, False
    else:
        n_chunks = -(-hw // hw_c)
        mask_tail = (hw % hw_c) != 0
    # TODO(synk): chunk the channel axis too for configs where even a single
    # (C, 128) chunk exceeds the VMEM budget.

    pool_kernel = functools.partial(
        _se_pool_gate_kernel, inv_hw=inv_hw, hw=hw, hw_c=hw_c,
        use_mxu=False, mask_tail=mask_tail)

    gate = pl.pallas_call(
        pool_kernel,
        out_shape=jax.ShapeDtypeStruct((b, c, 1), jnp.float32),
        grid_spec=pltpu.PrefetchScalarGridSpec(
            num_scalar_prefetch=0,
            grid=(b, n_chunks),
            in_specs=[
                pl.BlockSpec((1, c, hw_c), lambda bi, j: (bi, 0, j)),
                pl.BlockSpec((c, hidden), lambda bi, j: (0, 0)),
                pl.BlockSpec((hidden, c), lambda bi, j: (0, 0)),
            ],
            out_specs=pl.BlockSpec((1, c, 1), lambda bi, j: (bi, 0, 0)),
            scratch_shapes=[pltpu.VMEM((1, c), jnp.float32)],
        ),
        compiler_params=pltpu.CompilerParams(
            dimension_semantics=("parallel", "arbitrary"),
            vmem_limit_bytes=vmem_limit,
        ),
        cost_estimate=pl.CostEstimate(
            flops=int(b * c * hw + 4 * b * c * hidden),
            transcendentals=int(b * c),
            bytes_accessed=int(b * c * hw * dtype_bytes + 4 * b * c),
        ),
    )(x3, w1f, w2f)

    out3 = pl.pallas_call(
        _se_scale_kernel,
        out_shape=jax.ShapeDtypeStruct((b, c, hw), x_nchw.dtype),
        grid_spec=pltpu.PrefetchScalarGridSpec(
            num_scalar_prefetch=0,
            grid=(b, n_chunks),
            in_specs=[
                pl.BlockSpec((1, c, hw_c), lambda bi, j: (bi, 0, j)),
                pl.BlockSpec((1, c, 1), lambda bi, j: (bi, 0, 0)),
            ],
            out_specs=pl.BlockSpec((1, c, hw_c), lambda bi, j: (bi, 0, j)),
        ),
        compiler_params=pltpu.CompilerParams(
            dimension_semantics=("parallel", "parallel"),
            vmem_limit_bytes=vmem_limit,
        ),
        cost_estimate=pl.CostEstimate(
            flops=int(b * c * hw),
            transcendentals=0,
            bytes_accessed=int(2 * b * c * hw * dtype_bytes + 4 * b * c),
        ),
    )(x3, gate)
    return out3.reshape(b, c, h, w)


# --------------------------------------------------------------------------
# Pure-JAX reference (mirrors the PyTorch forward)
# --------------------------------------------------------------------------

def se_reference(x_nchw, w1, w2):
    xf = x_nchw.astype(jnp.float32)
    y = jnp.mean(xf, axis=(2, 3))                                    # (B, C)
    y = jnp.maximum(y @ w1.astype(jnp.float32), 0.0)
    s = jax.nn.sigmoid(y @ w2.astype(jnp.float32))
    return (xf * s[:, :, None, None]).astype(x_nchw.dtype)


if __name__ == "__main__":
    root = jax.random.PRNGKey(0)

    def make_inputs(seed_key, b, c, h, w, reduction, dtype):
        hidden = max(c // reduction, 1)
        kx, k1, k2 = jax.random.split(seed_key, 3)
        x = jax.random.normal(kx, (b, c, h, w), dtype=jnp.float32).astype(dtype)
        w1 = jax.random.normal(k1, (c, hidden), dtype=jnp.float32) * 0.1
        w2 = jax.random.normal(k2, (hidden, c), dtype=jnp.float32) * 0.1
        return x, w1, w2

    # Case 1: single-pass path, H*W = 64 (not a multiple of 128 -> masked tail).
    x, w1, w2 = make_inputs(jax.random.fold_in(root, 1), 2, 32, 8, 8, 16, jnp.float32)
    out = jax.block_until_ready(se_layer(x, w1, w2))
    ref = se_reference(x, w1, w2)
    assert out.shape == x.shape
    assert jnp.allclose(out, ref, atol=1e-5, rtol=1e-5), "f32 single-pass mismatch"

    # Case 2: single-pass path, lane-aligned H*W = 256, bf16 activations.
    x, w1, w2 = make_inputs(jax.random.fold_in(root, 2), 4, 32, 16, 16, 16, jnp.bfloat16)
    out = jax.block_until_ready(se_layer(x, w1, w2))
    ref = se_reference(x, w1, w2)
    assert out.shape == x.shape
    assert jnp.allclose(out.astype(jnp.float32), ref.astype(jnp.float32),
                        atol=5e-2, rtol=5e-2), "bf16 single-pass mismatch"

    # Case 3: two-pass fallback (tiny forced VMEM budget -> 128-lane HW chunks
    # with a masked tail chunk, H*W = 576).
    x, w1, w2 = make_inputs(jax.random.fold_in(root, 3), 2, 32, 24, 24, 16, jnp.float32)
    out = jax.block_until_ready(se_layer(x, w1, w2, x_vmem_budget=64 * 1024))
    ref = se_reference(x, w1, w2)
    assert out.shape == x.shape
    assert jnp.allclose(out, ref, atol=1e-5, rtol=1e-5), "two-pass fallback mismatch"

    print("KERNEL_OK")
</pallas_src>

<mosaic_0001>
module attributes {stable_mosaic.version = 11 : i64} {
  func.func @_se_fused_kernel(%arg0: i32, %arg1: memref<2x32x64xf32, #tpu.memory_space<vmem>>, %arg2: memref<32x2xf32, #tpu.memory_space<vmem>>, %arg3: memref<2x32xf32, #tpu.memory_space<vmem>>, %arg4: memref<2x32x64xf32, #tpu.memory_space<vmem>>) attributes {dimension_semantics = [#tpu.dimension_semantics<parallel>], iteration_bounds = array<i64: 1>, scalar_prefetch = 0 : i64, scratch_operands = 0 : i64, tpu.core_type = #tpu.core_type<tc>, window_params = [{transform_indices = @transform_0, window_bounds = array<i64: 2, 32, 64>}, {pipeline_mode = #tpu.pipeline_mode<synchronous>, transform_indices = @transform_1, window_bounds = array<i64: 32, 2>}, {pipeline_mode = #tpu.pipeline_mode<synchronous>, transform_indices = @transform_2, window_bounds = array<i64: 2, 32>}, {transform_indices = @transform_3, window_bounds = array<i64: 2, 32, 64>}]} {
    %c0 = arith.constant 0 : index
    %c0_0 = arith.constant 0 : index
    %c0_1 = arith.constant 0 : index
    %0 = vector.load %arg1[%c0, %c0_0, %c0_1] : memref<2x32x64xf32, #tpu.memory_space<vmem>>, vector<2x32x64xf32>
    %cst = arith.constant dense<0.000000e+00> : vector<2x32xf32>
    %1 = vector.multi_reduction <add>, %0, %cst [2] : vector<2x32x64xf32> to vector<2x32xf32>
    %cst_2 = arith.constant 1.562500e-02 : f32
    %2 = vector.broadcast %cst_2 : f32 to vector<2x32xf32>
    %3 = arith.mulf %1, %2 : vector<2x32xf32>
    %c0_3 = arith.constant 0 : index
    %c0_4 = arith.constant 0 : index
    %4 = vector.load %arg2[%c0_3, %c0_4] : memref<32x2xf32, #tpu.memory_space<vmem>>, vector<32x2xf32>
    %c0_5 = arith.constant 0 : index
    %c0_6 = arith.constant 0 : index
    %5 = vector.load %arg3[%c0_5, %c0_6] : memref<2x32xf32, #tpu.memory_space<vmem>>, vector<2x32xf32>
    %6 = vector.shape_cast %3 : vector<2x32xf32> to vector<2x32x1xf32>
    %7 = vector.shape_cast %4 : vector<32x2xf32> to vector<1x32x2xf32>
    %8 = vector.broadcast %6 : vector<2x32x1xf32> to vector<2x32x2xf32>
    %9 = vector.broadcast %7 : vector<1x32x2xf32> to vector<2x32x2xf32>
    %10 = arith.mulf %8, %9 : vector<2x32x2xf32>
    %cst_7 = arith.constant dense<0.000000e+00> : vector<2x2xf32>
    %11 = vector.multi_reduction <add>, %10, %cst_7 [1] : vector<2x32x2xf32> to vector<2x2xf32>
    %cst_8 = arith.constant 0.000000e+00 : f32
    %12 = vector.broadcast %cst_8 : f32 to vector<2x2xf32>
    %13 = arith.maximumf %11, %12 : vector<2x2xf32>
    %14 = vector.shape_cast %13 : vector<2x2xf32> to vector<2x2x1xf32>
    %15 = vector.shape_cast %5 : vector<2x32xf32> to vector<1x2x32xf32>
    %16 = vector.broadcast %14 : vector<2x2x1xf32> to vector<2x2x32xf32>
    %17 = vector.broadcast %15 : vector<1x2x32xf32> to vector<2x2x32xf32>
    %18 = arith.mulf %16, %17 : vector<2x2x32xf32>
    %cst_9 = arith.constant dense<0.000000e+00> : vector<2x32xf32>
    %19 = vector.multi_reduction <add>, %18, %cst_9 [1] : vector<2x2x32xf32> to vector<2x32xf32>
    %20 = arith.negf %19 : vector<2x32xf32>
    %21 = math.exp %20 : vector<2x32xf32>
    %cst_10 = arith.constant 1.000000e+00 : f32
    %22 = vector.broadcast %cst_10 : f32 to vector<2x32xf32>
    %23 = arith.addf %22, %21 : vector<2x32xf32>
    %24 = arith.divf %22, %23 : vector<2x32xf32>
    %c0_11 = arith.constant 0 : index
    %c0_12 = arith.constant 0 : index
    %c0_13 = arith.constant 0 : index
    %25 = vector.load %arg1[%c0_11, %c0_12, %c0_13] : memref<2x32x64xf32, #tpu.memory_space<vmem>>, vector<2x32x64xf32>
    %26 = vector.shape_cast %24 : vector<2x32xf32> to vector<2x32x1xf32>
    %27 = vector.broadcast %26 : vector<2x32x1xf32> to vector<2x32x64xf32>
    %28 = arith.mulf %25, %27 : vector<2x32x64xf32>
    %c0_14 = arith.constant 0 : index
    %c0_15 = arith.constant 0 : index
    %c0_16 = arith.constant 0 : index
    %29 = vector.load %arg4[%c0_14, %c0_15, %c0_16] : memref<2x32x64xf32, #tpu.memory_space<vmem>>, vector<2x32x64xf32>
    tpu.vector_store %arg4[%c0_14, %c0_15, %c0_16], %28 {strides = array<i32>} : memref<2x32x64xf32, #tpu.memory_space<vmem>>, vector<2x32x64xf32>,
    return
  }
  func.func @transform_0(%arg0: i32) -> (i32, i32, i32) {
    %c0_i32 = arith.constant 0 : i32
    %c0_i32_0 = arith.constant 0 : i32
    %c0_i32_1 = arith.constant 0 : i32
    return %arg0, %c0_i32, %c0_i32_0 : i32, i32, i32
  }
  func.func @transform_1(%arg0: i32) -> (i32, i32) {
    %c0_i32 = arith.constant 0 : i32
    %c0_i32_0 = arith.constant 0 : i32
    %c0_i32_1 = arith.constant 0 : i32
    return %c0_i32, %c0_i32_0 : i32, i32
  }
  func.func @transform_2(%arg0: i32) -> (i32, i32) {
    %c0_i32 = arith.constant 0 : i32
    %c0_i32_0 = arith.constant 0 : i32
    %c0_i32_1 = arith.constant 0 : i32
    return %c0_i32, %c0_i32_0 : i32, i32
  }
  func.func @transform_3(%arg0: i32) -> (i32, i32, i32) {
    %c0_i32 = arith.constant 0 : i32
    %c0_i32_0 = arith.constant 0 : i32
    %c0_i32_1 = arith.constant 0 : i32
    return %arg0, %c0_i32, %c0_i32_0 : i32, i32, i32
  }
}

</mosaic_0001>

<llo_original>
// kernel: tpu_custom_call.1
$region0: #{tpu_custom_call.1}
  #allocation0 [shape = 'u32[]', space=smem, size = 0x4, offset = 0x4, fixed_abs, tag = 'smem constant byte address 0x4 - core index']
  #allocation1 [shape = 'u32[144,128]{1,0:T(1,128)}', space=vmem, size = 0x12000, scoped, tag = 'internal scratch']
  %s0 = inlined_call_operand.hbm [shape: f32[2,32,64], index: 0, kind: input, shape index: {}]
  %s1 = inlined_call_operand.vmem [shape: f32[32,2], index: 1, kind: input, shape index: {}]
  %s2 = inlined_call_operand.vmem [shape: f32[2,32], index: 2, kind: input, shape index: {}]
  %s3 = inlined_call_operand.hbm [shape: f32[2,32,64], index: 3, kind: output, shape index: {}]
  %s4 = sld [smem:[#allocation0]]
  $region26: #{tpu_custom_call.1} parent=0
    _
  %s6 = ssub.s32 1, %s4
  %s7 = scalar_select 0, %s6, %s4
  $region1: #{tpu_custom_call.1} parent=0
    #allocation2 [shape = 'u8[32768]{0}', space=vmem, size = 0x8000, scoped, tag = 'input window, operand 0, single buffered']
    #allocation3 [shape = 's32[1]{0}', space=sflag, size = 0x4, scoped, tag = 'scoped memory for tpu_custom_call.1']
    #allocation4 [shape = 's32[1]{0}', space=sflag, size = 0x4, scoped, tag = 'scoped memory for tpu_custom_call.1']
    #allocation5 [shape = 'u8[32768]{0}', space=vmem, size = 0x8000, scoped, tag = 'output window, operand 0, single buffered']
    %8 = vsyncpa [#allocation3], 0
    %9 = vsyncpa [#allocation4], 0
    // Predicated region
    $region2: #{tpu_custom_call.1} parent=1 // pred_check
      _
    $region3: #{tpu_custom_call.1} parent=1 // pred_check_branch
      %11 = sbr.rel (0) target = $region5
    $region4: #{tpu_custom_call.1} parent=1 // pred_region
      %s13 = ssub.s32 1024, 1024
      %14 = vsyncadd [#allocation3], %s13
      %s15 = sshll.u32 [#allocation2], 4
      %s16 = int_to_ptr.vmem [resolvable:$true] %s15
      %21 = dma.hbm_to_vmem [thread:$0]  %s0, 1024, %s16, [#allocation3], 128, 128, 8
    $region5: #{tpu_custom_call.1} parent=1 // pred_fallthru
      _
    // Predicated region
    $region6: #{tpu_custom_call.1} parent=1 // pred_check
      _
    $region7: #{tpu_custom_call.1} parent=1 // pred_check_branch
      %23 = sbr.rel (0) target = $region9
    $region8: #{tpu_custom_call.1} parent=1 // pred_region
      _
    $region9: #{tpu_custom_call.1} parent=1 // pred_fallthru
      _
    // Predicated region
    $region10: #{tpu_custom_call.1} parent=1 // pred_check
      _
    $region11: #{tpu_custom_call.1} parent=1 // pred_check_branch
      %25 = sbr.rel (0) target = $region13
    $region12: #{tpu_custom_call.1} parent=1 // pred_region
      _
    $region13: #{tpu_custom_call.1} parent=1 // pred_fallthru
      _
    // Predicated region
    $region14: #{tpu_custom_call.1} parent=1 // pred_check
      _
    $region15: #{tpu_custom_call.1} parent=1 // pred_check_branch
      %27 = sbr.rel (0) target = $region17
    $region16: #{tpu_custom_call.1} parent=1 // pred_region
      %28 = dma.done [#allocation3], 1024
    $region17: #{tpu_custom_call.1} parent=1 // pred_fallthru
      _
    %v29 = vld [vmem:[#allocation2] sm:$0xff]
    %v30 = vld [vmem:[#allocation2 + $0x8] sm:$0xff]
    %v31 = vld [vmem:[#allocation2 + $0x10] sm:$0xff]
    %v32 = vld [vmem:[#allocation2 + $0x18] sm:$0xff]
    %v33 = vld [vmem:[#allocation2 + $0x20] sm:$0xff]
    %v34 = vld [vmem:[#allocation2 + $0x28] sm:$0xff]
    %v35 = vld [vmem:[#allocation2 + $0x30] sm:$0xff]
    %v36 = vld [vmem:[#allocation2 + $0x38] sm:$0xff]
    %vm37 = vcmask 523264
    %v38 = vsel %vm37, %v29, 0.0
    %39 = vadd.xlane.f32.xlu0 %v38
    %v40 = vpop.xlane.xlu0 %39
    %v41 = vsel %vm37, %v30, 0.0
    %42 = vadd.xlane.f32.xlu0 %v41
    %v43 = vpop.xlane.xlu0 %42
    %v44 = vsel %vm37, %v31, 0.0
    %45 = vadd.xlane.f32.xlu0 %v44
    %v46 = vpop.xlane.xlu0 %45
    %v47 = vsel %vm37, %v32, 0.0
    %48 = vadd.xlane.f32.xlu0 %v47
    %v49 = vpop.xlane.xlu0 %48
    %v50 = vsel %vm37, %v33, 0.0
    %51 = vadd.xlane.f32.xlu0 %v50
    %v52 = vpop.xlane.xlu0 %51
    %v53 = vsel %vm37, %v34, 0.0
    %54 = vadd.xlane.f32.xlu0 %v53
    %v55 = vpop.xlane.xlu0 %54
    %v56 = vsel %vm37, %v35, 0.0
    %57 = vadd.xlane.f32.xlu0 %v56
    %v58 = vpop.xlane.xlu0 %57
    %v59 = vsel %vm37, %v36, 0.0
    %60 = vadd.xlane.f32.xlu0 %v59
    %v61 = vpop.xlane.xlu0 %60
    %v62 = vmul.f32 %v40, 0.015625
    %v63 = vmul.f32 %v43, 0.015625
    %v64 = vmul.f32 %v46, 0.015625
    %v65 = vmul.f32 %v49, 0.015625
    %v66 = vmul.f32 %v52, 0.015625
    %v67 = vmul.f32 %v55, 0.015625
    %v68 = vmul.f32 %v58, 0.015625
    %v69 = vmul.f32 %v61, 0.015625
    %v70 = vld [vmem:[%s1] sm:$0xff]
    %v71 = vld [vmem:[%s1 + $0x8] sm:$0xff]
    %v72 = vld [vmem:[%s1 + $0x10] sm:$0xff]
    %v73 = vld [vmem:[%s1 + $0x18] sm:$0xff]
    %v74 = vld [vmem:[%s2] sm:$0x3]
    %v75 = vmul.f32 %v62, %v70
    %v76 = vmul.f32 %v63, %v71
    %v77 = vmul.f32 %v64, %v72
    %v78 = vmul.f32 %v65, %v73
    %v79 = vmul.f32 %v66, %v70
    %v80 = vmul.f32 %v67, %v71
    %v81 = vmul.f32 %v68, %v72
    %v82 = vmul.f32 %v69, %v73
    %vm83 = vcmask 15360
    %v84 = vsel %vm83, %v75, 0.0
    %v85 = vsel %vm83, %v76, 0.0
    %v86 = vadd.f32 %v84, %v85
    %v87 = vsel %vm83, %v77, 0.0
    %v88 = vadd.f32 %v86, %v87
    %v89 = vsel %vm83, %v78, 0.0
    %v90 = vadd.f32 %v88, %v89
    %v91 = vrot.slane %v90, 4
    %v92 = vadd.f32 %v90, %v91
    %v93 = vrot.slane %v92, 2
    %v94 = vadd.f32 %v92, %v93
    %v95 = vrot.slane %v94, 1
    %v96 = vadd.f32 %v94, %v95
    %v97 = vsel %vm83, %v79, 0.0
    %v98 = vsel %vm83, %v80, 0.0
    %v99 = vadd.f32 %v97, %v98
    %v100 = vsel %vm83, %v81, 0.0
    %v101 = vadd.f32 %v99, %v100
    %v102 = vsel %vm83, %v82, 0.0
    %v103 = vadd.f32 %v101, %v102
    %v104 = vrot.slane %v103, 4
    %v105 = vadd.f32 %v103, %v104
    %v106 = vrot.slane %v105, 2
    %v107 = vadd.f32 %v105, %v106
    %v108 = vrot.slane %v107, 1
    %v109 = vadd.f32 %v107, %v108
    %v110 = vmax.f32 %v96, 0.0
    %v111 = vmax.f32 %v109, 0.0
    %113 = vbcast.lane.b32.xlu0 %v110, 256
    %v114 = vpop.permute.xlu0 %113
    %116 = vbcast.lane.b32.xlu0 %v111, 256
    %v117 = vpop.permute.xlu0 %116
    %v118 = vmul.f32 %v114, %v74
    %v119 = vmul.f32 %v117, %v74
    %vm120 = vcmask 254976
    %v121 = vsel %vm120, %v118, 0.0
    %v122 = vrot.slane %v121, 4
    %v123 = vadd.f32 %v121, %v122
    %v124 = vrot.slane %v123, 2
    %v125 = vadd.f32 %v123, %v124
    %v126 = vrot.slane %v125, 1
    %v127 = vadd.f32 %v125, %v126
    %v128 = vsel %vm120, %v119, 0.0
    %v129 = vrot.slane %v128, 4
    %v130 = vadd.f32 %v128, %v129
    %v131 = vrot.slane %v130, 2
    %v132 = vadd.f32 %v130, %v131
    %v133 = vrot.slane %v132, 1
    %v134 = vadd.f32 %v132, %v133
    %v135 = vxor.u32 %v127, 2147483648
    %v136 = vxor.u32 %v134, 2147483648
    %v137 = vmul.f32 %v135, 1.442695
    %v138 = vpow.pop %v137
    %v139 = vmul.f32 %v136, 1.442695
    %v140 = vpow.pop %v139
    %v141 = vadd.f32 %v138, 1.0
    %v142 = vadd.f32 %v140, 1.0
    %v143 = vrcp.pop %v141
    %v144 = vmul.f32 1.0, %v143
    %v145 = vrcp.pop %v142
    %v146 = vmul.f32 1.0, %v145
    %148 = vbcast.lane.b32.xlu0 %v144, 256
    %v149 = vpop.permute.xlu0 %148
    %s151 = sor.u32 256, 8
    %152 = vbcast.lane.b32.xlu0 %v144, %s151
    %v153 = vpop.permute.xlu0 %152
    %s155 = sor.u32 256, 16
    %156 = vbcast.lane.b32.xlu0 %v144, %s155
    %v157 = vpop.permute.xlu0 %156
    %s159 = sor.u32 256, 24
    %160 = vbcast.lane.b32.xlu0 %v144, %s159
    %v161 = vpop.permute.xlu0 %160
    %163 = vbcast.lane.b32.xlu0 %v146, 256
    %v164 = vpop.permute.xlu0 %163
    %s166 = sor.u32 256, 8
    %167 = vbcast.lane.b32.xlu0 %v146, %s166
    %v168 = vpop.permute.xlu0 %167
    %s170 = sor.u32 256, 16
    %171 = vbcast.lane.b32.xlu0 %v146, %s170
    %v172 = vpop.permute.xlu0 %171
    %s174 = sor.u32 256, 24
    %175 = vbcast.lane.b32.xlu0 %v146, %s174
    %v176 = vpop.permute.xlu0 %175
    %v177 = vmul.f32 %v29, %v149
    %v178 = vmul.f32 %v30, %v153
    %v179 = vmul.f32 %v31, %v157
    %v180 = vmul.f32 %v32, %v161
    %v181 = vmul.f32 %v33, %v164
    %v182 = vmul.f32 %v34, %v168
    %v183 = vmul.f32 %v35, %v172
    %v184 = vmul.f32 %v36, %v176
    %185 = vst.msk [vmem:[#allocation5] sm:$0xff] %vm37, %v177
    %186 = vst.msk [vmem:[#allocation5 + $0x8] sm:$0xff] %vm37, %v178
    %187 = vst.msk [vmem:[#allocation5 + $0x10] sm:$0xff] %vm37, %v179
    %188 = vst.msk [vmem:[#allocation5 + $0x18] sm:$0xff] %vm37, %v180
    %189 = vst.msk [vmem:[#allocation5 + $0x20] sm:$0xff] %vm37, %v181
    %190 = vst.msk [vmem:[#allocation5 + $0x28] sm:$0xff] %vm37, %v182
    %191 = vst.msk [vmem:[#allocation5 + $0x30] sm:$0xff] %vm37, %v183
    %192 = vst.msk [vmem:[#allocation5 + $0x38] sm:$0xff] %vm37, %v184
    // Predicated region
    $region18: #{tpu_custom_call.1} parent=1 // pred_check
      _
    $region19: #{tpu_custom_call.1} parent=1 // pred_check_branch
      %194 = sbr.rel (0) target = $region21
    $region20: #{tpu_custom_call.1} parent=1 // pred_region
      %s196 = ssub.s32 1024, 1024
      %197 = vsyncadd [#allocation4], %s196
      %s198 = sshll.u32 [#allocation5], 4
      %s199 = int_to_ptr.vmem [resolvable:$true] %s198
      %204 = dma.vmem_to_hbm [thread:$0]  %s199, 1024, %s3, [#allocation4], 128, 128, 8
    $region21: #{tpu_custom_call.1} parent=1 // pred_fallthru
      _
    // Predicated region
    $region22: #{tpu_custom_call.1} parent=1 // pred_check
      _
    $region23: #{tpu_custom_call.1} parent=1 // pred_check_branch
      %206 = sbr.rel (0) target = $region25
    $region24: #{tpu_custom_call.1} parent=1 // pred_region
      %207 = dma.done [#allocation4], 1024
    $region25: #{tpu_custom_call.1} parent=1 // pred_fallthru
      _
    %208 = vsyncpa [#allocation3], 1
    %209 = vsyncpa [#allocation4], 1

</llo_original>
